<compile_context>
chip_gen: v6e
topology: v6e:2x2x1
jax: 0.10.0
libtpu: 0.0.40
codegen_flags: <defaults>
</compile_context>

<pallas_src>
import jax
import jax.numpy as jnp
from jax.experimental import pallas as pl
from jax.experimental.pallas import tpu as pltpu


def _round_up(x: int, m: int) -> int:
    return ((x + m - 1) // m) * m


# ---------------------------------------------------------------------------
# Kernels
# ---------------------------------------------------------------------------
def _mlp_kernel_single_k(x_ref, w_ref, b_ref, o_ref):
    # Whole reduction in one step: no accumulator, no init/finalize branches.
    y = jnp.dot(x_ref[...], w_ref[...], preferred_element_type=jnp.float32)
    o_ref[...] = jnp.tanh(y + b_ref[...]).astype(o_ref.dtype)


def _mlp_kernel_multi_k_f32out(x_ref, w_ref, b_ref, o_ref):
    # f32 output: accumulate straight into the output block, which stays
    # resident across k because its index_map ignores k (no extra scratch).
    k = pl.program_id(2)

    @pl.when(k == 0)
    def _():
        o_ref[...] = jnp.zeros_like(o_ref)

    o_ref[...] += jnp.dot(x_ref[...], w_ref[...], preferred_element_type=jnp.float32)

    @pl.when(k == pl.num_programs(2) - 1)
    def _():
        o_ref[...] = jnp.tanh(o_ref[...] + b_ref[...])


def _mlp_kernel_multi_k_scratch(x_ref, w_ref, b_ref, o_ref, acc_ref):
    # Non-f32 output: f32 scratch accumulator, cast only on the final store.
    k = pl.program_id(2)

    @pl.when(k == 0)
    def _():
        acc_ref[...] = jnp.zeros_like(acc_ref)

    acc_ref[...] += jnp.dot(x_ref[...], w_ref[...], preferred_element_type=jnp.float32)

    @pl.when(k == pl.num_programs(2) - 1)
    def _():
        o_ref[...] = jnp.tanh(acc_ref[...] + b_ref[...]).astype(o_ref.dtype)


# ---------------------------------------------------------------------------
# Wrapper
# ---------------------------------------------------------------------------
def _plan_nk(N, K, tn=None, tk=None):
    if tn is None:
        tn = min(512, _round_up(N, 128))
    if tk is None:
        tk = min(1024, _round_up(K, 128))
    Np = _round_up(N, tn)
    Kp = _round_up(K, tk)
    return tn, tk, Np, Kp


def prepare_mlp_params(weight, bias, *, input_dtype=jnp.bfloat16, tn=None, tk=None):
    """One-time weight prep: transpose to [K, N] (MXU-ready, no in-kernel .T),
    optional cast to the MXU input dtype, and pad to tile multiples.

    Do this ONCE per set of weights and reuse the result across calls; the
    per-call hot path then only touches the activations."""
    N, K = weight.shape
    assert bias.shape == (N,)
    tn, tk, Np, Kp = _plan_nk(N, K, tn, tk)

    w_kn = jnp.transpose(weight)                       # [out,in] -> [K, N]
    if input_dtype is not None:
        w_kn = w_kn.astype(input_dtype)
    w_p = jnp.pad(w_kn, ((0, Kp - K), (0, Np - N)))    # zero K/N padding is exact
    b_p = jnp.pad(bias.astype(jnp.float32), (0, Np - N)).reshape(1, Np)

    return {
        "w_p": w_p, "b_p": b_p,
        "N": N, "K": K, "tn": tn, "tk": tk, "Np": Np, "Kp": Kp,
        "input_dtype": input_dtype,
    }


def mlp_layer_apply(features, params, *, tm=None, out_dtype=None):
    """features: [B, K] -> tanh(features @ W.T + b): [B, N]."""
    B, K = features.shape
    assert K == params["K"]
    N, Np, Kp = params["N"], params["Np"], params["Kp"]
    tn, tk = params["tn"], params["tk"]
    input_dtype = params["input_dtype"]
    if out_dtype is None:
        out_dtype = features.dtype

    # ---- balanced M tiling: avoid a trailing tile that is ~all padding ----
    if tm is None:
        n_m = -(-B // 256)                      # number of M tiles at a 256 cap
        tm = _round_up(-(-B // n_m), 8)
    Mp = _round_up(B, tm)

    grid_m, grid_n, grid_k = Mp // tm, Np // tn, Kp // tk

    # v7x megacore: guarantee >= 2 tiles along a 'parallel' axis when possible
    # so the second TensorCore isn't idle on single-tile shapes.
    if grid_m * grid_n == 1 and tn % 256 == 0:
        tn //= 2
        grid_n = Np // tn

    x_in = features if input_dtype is None else features.astype(input_dtype)
    x_p = jnp.pad(x_in, ((0, Mp - B), (0, Kp - K)))

    in_itemsize = jnp.dtype(x_p.dtype).itemsize
    out_itemsize = jnp.dtype(out_dtype).itemsize
    cost = pl.CostEstimate(
        flops=2 * Mp * Np * Kp,
        transcendentals=Mp * Np,
        bytes_accessed=(Mp * Kp * in_itemsize) * grid_n   # x re-read per N tile
        + (Kp * Np * in_itemsize) * grid_m                # W re-read per M tile
        + Np * 4 * grid_m                                 # bias
        + Mp * Np * out_itemsize,                         # output
    )

    # ~5 MiB double-buffered footprint at default tiles; 32 MiB scoped limit is
    # safe on v5e (128 MiB phys), v6e (128 MiB) and v7x (64 MiB).
    vmem_limit = 32 * 1024 * 1024

    if grid_k == 1:
        out_p = pl.pallas_call(
            _mlp_kernel_single_k,
            out_shape=jax.ShapeDtypeStruct((Mp, Np), out_dtype),
            grid_spec=pltpu.PrefetchScalarGridSpec(
                num_scalar_prefetch=0,
                grid=(grid_m, grid_n),
                in_specs=[
                    pl.BlockSpec((tm, Kp), lambda i, j: (i, 0)),   # x tile
                    pl.BlockSpec((Kp, tn), lambda i, j: (0, j)),   # W.T tile
                    pl.BlockSpec((1, tn), lambda i, j: (0, j)),    # bias tile
                ],
                out_specs=pl.BlockSpec((tm, tn), lambda i, j: (i, j)),
            ),
            compiler_params=pltpu.CompilerParams(
                dimension_semantics=("parallel", "parallel"),
                vmem_limit_bytes=vmem_limit,
            ),
            cost_estimate=cost,
        )(x_p, params["w_p"], params["b_p"])
    else:
        x_spec = pl.BlockSpec((tm, tk), lambda i, j, k: (i, k))
        w_spec = pl.BlockSpec((tk, tn), lambda i, j, k: (k, j))
        b_spec = pl.BlockSpec((1, tn), lambda i, j, k: (0, j))
        o_spec = pl.BlockSpec((tm, tn), lambda i, j, k: (i, j))
        cparams = pltpu.CompilerParams(
            dimension_semantics=("parallel", "parallel", "arbitrary"),
            vmem_limit_bytes=vmem_limit,
        )
        if jnp.dtype(out_dtype) == jnp.dtype(jnp.float32):
            out_p = pl.pallas_call(
                _mlp_kernel_multi_k_f32out,
                out_shape=jax.ShapeDtypeStruct((Mp, Np), jnp.float32),
                grid_spec=pltpu.PrefetchScalarGridSpec(
                    num_scalar_prefetch=0,
                    grid=(grid_m, grid_n, grid_k),
                    in_specs=[x_spec, w_spec, b_spec],
                    out_specs=o_spec,
                ),
                compiler_params=cparams,
                cost_estimate=cost,
            )(x_p, params["w_p"], params["b_p"])
        else:
            out_p = pl.pallas_call(
                _mlp_kernel_multi_k_scratch,
                out_shape=jax.ShapeDtypeStruct((Mp, Np), out_dtype),
                grid_spec=pltpu.PrefetchScalarGridSpec(
                    num_scalar_prefetch=0,
                    grid=(grid_m, grid_n, grid_k),
                    in_specs=[x_spec, w_spec, b_spec],
                    out_specs=o_spec,
                    scratch_shapes=[pltpu.VMEM((tm, tn), jnp.float32)],
                ),
                compiler_params=cparams,
                cost_estimate=cost,
            )(x_p, params["w_p"], params["b_p"])

    return out_p[:B, :N]


def mlp_layer(features, weight, bias, *, input_dtype=jnp.bfloat16,
              tm=None, tn=None, tk=None, out_dtype=None):
    """Convenience one-shot wrapper.  For repeated calls with the same weights,
    call prepare_mlp_params(...) once and mlp_layer_apply(...) per call."""
    params = prepare_mlp_params(weight, bias, input_dtype=input_dtype, tn=tn, tk=tk)
    return mlp_layer_apply(features, params, tm=tm, out_dtype=out_dtype)


if __name__ == "__main__":
    key = jax.random.PRNGKey(0)
    k1, k2, k3 = jax.random.split(key, 3)

    # ---- small config matching the module (config.hidden_size = 32) ----
    batch, hidden = 8, 32
    features = jax.random.normal(k1, (batch, hidden), dtype=jnp.float32)
    bound = 1.0 / (hidden ** 0.5)
    weight = jax.random.uniform(k2, (hidden, hidden), jnp.float32, -bound, bound)
    bias = jax.random.uniform(k3, (hidden,), jnp.float32, -bound, bound)
    ref = jnp.tanh(features @ weight.T + bias)

    # Default path: bf16 MXU inputs, f32 accumulate / bias / tanh.
    out_bf16 = mlp_layer(features, weight, bias)
    jax.block_until_ready(out_bf16)
    assert out_bf16.shape == ref.shape
    assert jnp.allclose(out_bf16, ref, atol=3e-2, rtol=3e-2), "bf16 path mismatch"

    # f32 MXU path: bit-tight against the f32 reference.
    out_f32 = mlp_layer(features, weight, bias, input_dtype=None)
    jax.block_until_ready(out_f32)
    assert jnp.allclose(out_f32, ref, atol=1e-5, rtol=1e-5), "f32 path mismatch"

    # ---- multi-tile / multi-k / padded-grid path (forced small tiles) ----
    k4, k5, k6 = jax.random.split(jax.random.PRNGKey(1), 3)
    b2, h2 = 200, 384  # non-multiples -> exercises M padding, N tiling, K loop
    f2 = jax.random.normal(k4, (b2, h2), dtype=jnp.float32)
    bnd2 = 1.0 / (h2 ** 0.5)
    w2 = jax.random.uniform(k5, (h2, h2), jnp.float32, -bnd2, bnd2)
    bz2 = jax.random.uniform(k6, (h2,), jnp.float32, -bnd2, bnd2)
    ref2 = jnp.tanh(f2 @ w2.T + bz2)

    params2 = prepare_mlp_params(w2, bz2, input_dtype=None, tn=128, tk=128)
    out2 = mlp_layer_apply(f2, params2, tm=64)        # grid (4, 3, 3), f32 exact
    jax.block_until_ready(out2)
    assert jnp.allclose(out2, ref2, atol=1e-4, rtol=1e-4), "multi-k path mismatch"

    # Default (bf16, big-tile, single-k) path with weights prepared once.
    params3 = prepare_mlp_params(w2, bz2)
    out3 = mlp_layer_apply(f2, params3)
    jax.block_until_ready(out3)
    assert jnp.allclose(out3, ref2, atol=5e-2, rtol=5e-2), "bf16 tiled mismatch"

    print("KERNEL_OK")
</pallas_src>

<mosaic_0001>
module attributes {stable_mosaic.version = 11 : i64} {
  func.func @_mlp_kernel_single_k(%arg0: i32, %arg1: i32, %arg2: memref<8x128xbf16, #tpu.memory_space<vmem>>, %arg3: memref<128x128xbf16, #tpu.memory_space<vmem>>, %arg4: memref<1x128xf32, #tpu.memory_space<vmem>>, %arg5: memref<8x128xf32, #tpu.memory_space<vmem>>) attributes {dimension_semantics = [#tpu.dimension_semantics<parallel>, #tpu.dimension_semantics<parallel>], iteration_bounds = array<i64: 1, 1>, scalar_prefetch = 0 : i64, scratch_operands = 0 : i64, tpu.core_type = #tpu.core_type<tc>, window_params = [{transform_indices = @transform_0, window_bounds = array<i64: 8, 128>}, {transform_indices = @transform_1, window_bounds = array<i64: 128, 128>}, {transform_indices = @transform_2, window_bounds = array<i64: 1, 128>}, {transform_indices = @transform_3, window_bounds = array<i64: 8, 128>}]} {
    %c0 = arith.constant 0 : index
    %c0_0 = arith.constant 0 : index
    %0 = vector.load %arg2[%c0, %c0_0] : memref<8x128xbf16, #tpu.memory_space<vmem>>, vector<8x128xbf16>
    %c0_1 = arith.constant 0 : index
    %c0_2 = arith.constant 0 : index
    %1 = vector.load %arg3[%c0_1, %c0_2] : memref<128x128xbf16, #tpu.memory_space<vmem>>, vector<128x128xbf16>
    %cst = arith.constant dense<0.000000e+00> : vector<8x128xf32>
    %2 = tpu.matmul %0, %1, %cst {dimension_numbers = #tpu.dot_dimension_numbers<[1], [0], [0], [1], [0, 0, 1, 1], [], []>} : vector<8x128xbf16>, vector<128x128xbf16>, vector<8x128xf32> -> vector<8x128xf32>
    %c0_3 = arith.constant 0 : index
    %c0_4 = arith.constant 0 : index
    %3 = vector.load %arg4[%c0_3, %c0_4] : memref<1x128xf32, #tpu.memory_space<vmem>>, vector<1x128xf32>
    %4 = vector.broadcast %3 : vector<1x128xf32> to vector<8x128xf32>
    %5 = arith.addf %2, %4 : vector<8x128xf32>
    %6 = math.tanh %5 : vector<8x128xf32>
    %c0_5 = arith.constant 0 : index
    %c0_6 = arith.constant 0 : index
    %7 = vector.load %arg5[%c0_5, %c0_6] : memref<8x128xf32, #tpu.memory_space<vmem>>, vector<8x128xf32>
    tpu.vector_store %arg5[%c0_5, %c0_6], %6 {strides = array<i32>} : memref<8x128xf32, #tpu.memory_space<vmem>>, vector<8x128xf32>,
    return
  }
  func.func @transform_0(%arg0: i32, %arg1: i32) -> (i32, i32) {
    %c0_i32 = arith.constant 0 : i32
    %c0_i32_0 = arith.constant 0 : i32
    return %arg0, %c0_i32 : i32, i32
  }
  func.func @transform_1(%arg0: i32, %arg1: i32) -> (i32, i32) {
    %c0_i32 = arith.constant 0 : i32
    %c0_i32_0 = arith.constant 0 : i32
    return %c0_i32, %arg1 : i32, i32
  }
  func.func @transform_2(%arg0: i32, %arg1: i32) -> (i32, i32) {
    %c0_i32 = arith.constant 0 : i32
    %c0_i32_0 = arith.constant 0 : i32
    return %c0_i32, %arg1 : i32, i32
  }
  func.func @transform_3(%arg0: i32, %arg1: i32) -> (i32, i32) {
    %c0_i32 = arith.constant 0 : i32
    return %arg0, %arg1 : i32, i32
  }
}

</mosaic_0001>

<llo_original>
// kernel: tpu_custom_call.1
$region0: #{tpu_custom_call.1}
  #allocation0 [shape = 'u32[]', space=smem, size = 0x4, offset = 0x4, fixed_abs, tag = 'smem constant byte address 0x4 - core index']
  #allocation1 [shape = 'u32[144,128]{1,0:T(1,128)}', space=vmem, size = 0x12000, scoped, tag = 'internal scratch']
  %s0 = inlined_call_operand.hbm [shape: bf16[8,128], index: 0, kind: input, shape index: {}]
  %s1 = inlined_call_operand.hbm [shape: bf16[128,128], index: 1, kind: input, shape index: {}]
  %s2 = inlined_call_operand.vmem [shape: f32[1,128], index: 2, kind: input, shape index: {}]
  %s3 = inlined_call_operand.hbm [shape: f32[8,128], index: 3, kind: output, shape index: {}]
  %s4 = sld [smem:[#allocation0]]
  $region30: #{tpu_custom_call.1} parent=0
    _
  %s6 = ssub.s32 1, %s4
  %s7 = scalar_select 0, %s6, %s4
  $region1: #{tpu_custom_call.1} parent=0
    #allocation2 [shape = 'u8[2048]{0}', space=vmem, size = 0x800, scoped, tag = 'input window, operand 0, single buffered']
    #allocation3 [shape = 's32[1]{0}', space=sflag, size = 0x4, scoped, tag = 'scoped memory for tpu_custom_call.1']
    #allocation4 [shape = 's32[1]{0}', space=sflag, size = 0x4, scoped, tag = 'scoped memory for tpu_custom_call.1']
    #allocation5 [shape = 'u8[32768]{0}', space=vmem, size = 0x8000, scoped, tag = 'input window, operand 1, single buffered']
    #allocation6 [shape = 's32[1]{0}', space=sflag, size = 0x4, scoped, tag = 'scoped memory for tpu_custom_call.1']
    #allocation7 [shape = 'u8[4096]{0}', space=vmem, size = 0x1000, scoped, tag = 'output window, operand 0, single buffered']
    %8 = vsyncpa [#allocation3], 0
    %9 = vsyncpa [#allocation6], 0
    %10 = vsyncpa [#allocation4], 0
    // Predicated region
    $region2: #{tpu_custom_call.1} parent=1 // pred_check
      _
    $region3: #{tpu_custom_call.1} parent=1 // pred_check_branch
      %12 = sbr.rel (0) target = $region5
    $region4: #{tpu_custom_call.1} parent=1 // pred_region
      %s14 = ssub.s32 64, 64
      %15 = vsyncadd [#allocation3], %s14
      %s17 = sshll.u32 [#allocation2], 4
      %s18 = int_to_ptr.vmem [resolvable:$true] %s17
      %20 = dma.hbm_to_vmem [thread:$0]  %s0, 64, %s18, [#allocation3]
    $region5: #{tpu_custom_call.1} parent=1 // pred_fallthru
      _
    // Predicated region
    $region6: #{tpu_custom_call.1} parent=1 // pred_check
      _
    $region7: #{tpu_custom_call.1} parent=1 // pred_check_branch
      %22 = sbr.rel (0) target = $region9
    $region8: #{tpu_custom_call.1} parent=1 // pred_region
      %s24 = ssub.s32 1024, 1024
      %25 = vsyncadd [#allocation6], %s24
      %s26 = sshll.u32 [#allocation5], 4
      %s27 = int_to_ptr.vmem [resolvable:$true] %s26
      %32 = dma.hbm_to_vmem [thread:$0]  %s1, 1024, %s27, [#allocation6], 64, 64, 4
    $region9: #{tpu_custom_call.1} parent=1 // pred_fallthru
      _
    // Predicated region
    $region10: #{tpu_custom_call.1} parent=1 // pred_check
      _
    $region11: #{tpu_custom_call.1} parent=1 // pred_check_branch
      %34 = sbr.rel (0) target = $region13
    $region12: #{tpu_custom_call.1} parent=1 // pred_region
      _
    $region13: #{tpu_custom_call.1} parent=1 // pred_fallthru
      _
    // Predicated region
    $region14: #{tpu_custom_call.1} parent=1 // pred_check
      _
    $region15: #{tpu_custom_call.1} parent=1 // pred_check_branch
      %36 = sbr.rel (0) target = $region17
    $region16: #{tpu_custom_call.1} parent=1 // pred_region
      %37 = dma.done [#allocation3], 64
    $region17: #{tpu_custom_call.1} parent=1 // pred_fallthru
      _
    // Predicated region
    $region18: #{tpu_custom_call.1} parent=1 // pred_check
      _
    $region19: #{tpu_custom_call.1} parent=1 // pred_check_branch
      %39 = sbr.rel (0) target = $region21
    $region20: #{tpu_custom_call.1} parent=1 // pred_region
      %40 = dma.done [#allocation6], 1024
    $region21: #{tpu_custom_call.1} parent=1 // pred_fallthru
      _
    %v42 = vld [vmem:[#allocation2] sm:$0xf]
    %v43 = vld [vmem:[#allocation5] sm:$0xf]
    %v44 = vld [vmem:[#allocation5 + $0x4] sm:$0xf]
    %v45 = vld [vmem:[#allocation5 + $0x8] sm:$0xf]
    %v46 = vld [vmem:[#allocation5 + $0xc] sm:$0xf]
    %v47 = vld [vmem:[#allocation5 + $0x10] sm:$0xf]
    %v48 = vld [vmem:[#allocation5 + $0x14] sm:$0xf]
    %v49 = vld [vmem:[#allocation5 + $0x18] sm:$0xf]
    %v50 = vld [vmem:[#allocation5 + $0x1c] sm:$0xf]
    %v51 = vld [vmem:[#allocation5 + $0x20] sm:$0xf]
    %v52 = vld [vmem:[#allocation5 + $0x24] sm:$0xf]
    %v53 = vld [vmem:[#allocation5 + $0x28] sm:$0xf]
    %v54 = vld [vmem:[#allocation5 + $0x2c] sm:$0xf]
    %v55 = vld [vmem:[#allocation5 + $0x30] sm:$0xf]
    %v56 = vld [vmem:[#allocation5 + $0x34] sm:$0xf]
    %v57 = vld [vmem:[#allocation5 + $0x38] sm:$0xf]
    %v58 = vld [vmem:[#allocation5 + $0x3c] sm:$0xf]
    %v59 = vld [vmem:[%s2] sm:$0x1]
    %v61 = vlaneseq
    %v62 = vshrl.u32 %v61, 7
    %v63 = vsub.s32 0, %v62
    %v64 = vrot.slane %v59, %v63
    %v82 = vunpack.c.l.b16 %v43
    %v83 = vunpack.c.l.b16 %v44
    %v84 = vunpack.c.l.b16 %v45
    %v85 = vunpack.c.l.b16 %v46
    %v86 = vunpack.c.l.b16 %v47
    %v87 = vunpack.c.l.b16 %v48
    %v88 = vunpack.c.l.b16 %v49
    %v89 = vunpack.c.l.b16 %v50
    %v90 = vunpack.c.l.b16 %v51
    %v91 = vunpack.c.l.b16 %v52
    %v92 = vunpack.c.l.b16 %v53
    %v93 = vunpack.c.l.b16 %v54
    %v94 = vunpack.c.l.b16 %v55
    %v95 = vunpack.c.l.b16 %v56
    %v96 = vunpack.c.l.b16 %v57
    %v97 = vunpack.c.l.b16 %v58
    %v98 = vpack.c.b16 %v83, %v82
    %v99 = vpack.c.b16 %v85, %v84
    %v100 = vpack.c.b16 %v87, %v86
    %v101 = vpack.c.b16 %v89, %v88
    %v102 = vpack.c.b16 %v91, %v90
    %v103 = vpack.c.b16 %v93, %v92
    %v104 = vpack.c.b16 %v95, %v94
    %v105 = vpack.c.b16 %v97, %v96
    %114 = vmatprep.subr.bf16.mxu0 0
    %115 = vmatpush1.bf16.msra.mxu0 %v105
    %116 = vmatprep.subr.bf16.mxu0 0
    %117 = vmatpush1.bf16.msra.mxu0 %v104
    %118 = vmatprep.subr.bf16.mxu0 0
    %119 = vmatpush1.bf16.msra.mxu0 %v103
    %120 = vmatprep.subr.bf16.mxu0 0
    %121 = vmatpush1.bf16.msra.mxu0 %v102
    %122 = vmatprep.subr.bf16.mxu0 0
    %123 = vmatpush1.bf16.msra.mxu0 %v101
    %124 = vmatprep.subr.bf16.mxu0 0
    %125 = vmatpush1.bf16.msra.mxu0 %v100
    %126 = vmatprep.subr.bf16.mxu0 0
    %127 = vmatpush1.bf16.msra.mxu0 %v99
    %128 = vmatprep.subr.bf16.mxu0 0
    %129 = vmatpush1.bf16.msra.mxu0 %v98
    %130 = vmatprep.subr.bf16.mxu0 0
    %131 = vmatpush2.bf16.msra.mxu0 0
    %132 = vmatprep.subr.bf16.mxu0 0
    %133 = vmatpush2.bf16.msra.mxu0 0
    %134 = vmatprep.subr.bf16.mxu0 0
    %135 = vmatpush2.bf16.msra.mxu0 0
    %136 = vmatprep.subr.bf16.mxu0 0
    %137 = vmatpush2.bf16.msra.mxu0 0
    %138 = vmatprep.subr.bf16.mxu0 0
    %139 = vmatpush2.bf16.msra.mxu0 0
    %140 = vmatprep.subr.bf16.mxu0 0
    %141 = vmatpush2.bf16.msra.mxu0 0
    %142 = vmatprep.subr.bf16.mxu0 0
    %143 = vmatpush2.bf16.msra.mxu0 0
    %144 = vmatprep.subr.bf16.mxu0 0
    %145 = vmatpush2.bf16.msra.mxu0 0
    %146 = vmatprep.mubr.bf16.mxu0 0
    %147 = vmatmul.mubr.bf16.gmra.mxu0 %v42
    %v148 = vpop.f32.mrf.mxu0
    %v149 = vadd.f32 %v64, %v148
    %v150 = vpop.f32.mrf.mxu0
    %v151 = vpop.f32.mrf.mxu0
    %v152 = vpop.f32.mrf.mxu0
    %153 = vdwg.mxu0
    %v154 = vtanh.pop %v149
    %155 = vst [vmem:[#allocation7] sm:$0xff] %v154
    // Predicated region
    $region22: #{tpu_custom_call.1} parent=1 // pred_check
      _
    $region23: #{tpu_custom_call.1} parent=1 // pred_check_branch
      %157 = sbr.rel (0) target = $region25
    $region24: #{tpu_custom_call.1} parent=1 // pred_region
      %s159 = ssub.s32 128, 128
      %160 = vsyncadd [#allocation4], %s159
      %s162 = sshll.u32 [#allocation7], 4
      %s163 = int_to_ptr.vmem [resolvable:$true] %s162
      %165 = dma.vmem_to_hbm [thread:$0]  %s163, 128, %s3, [#allocation4]
    $region25: #{tpu_custom_call.1} parent=1 // pred_fallthru
      _
    // Predicated region
    $region26: #{tpu_custom_call.1} parent=1 // pred_check
      _
    $region27: #{tpu_custom_call.1} parent=1 // pred_check_branch
      %167 = sbr.rel (0) target = $region29
    $region28: #{tpu_custom_call.1} parent=1 // pred_region
      %168 = dma.done [#allocation4], 128
    $region29: #{tpu_custom_call.1} parent=1 // pred_fallthru
      _
    %169 = vsyncpa [#allocation3], 1
    %170 = vsyncpa [#allocation6], 1
    %171 = vsyncpa [#allocation4], 1

</llo_original>
